<compile_context>
chip_gen: v5e
topology: v5e:2x2
jax: 0.10.0
libtpu: 0.0.40
codegen_flags: <defaults>
</compile_context>

<pallas_src>
import jax
import jax.numpy as jnp
from jax.experimental import pallas as pl
from jax.experimental.pallas import tpu as pltpu


def _siamese_decoder_kernel(x_ref, w_ref, b_ref, o_ref, acc_ref):
    # x_ref  : [b_tile, C, hw_tile]   current spatial tile (hw_tile % 128 == 0)
    # w_ref  : [C, out_pad]           weight.T / HW, zero-padded to 128 lanes
    # b_ref  : [1, out_pad]           bias, zero-padded
    # o_ref  : [1, b_tile, out_pad]
    # acc_ref: [b_tile, C, 128] f32   lane-group partial-sum accumulator
    k = pl.program_id(1)

    @pl.when(k == 0)
    def _init():
        acc_ref[...] = jnp.zeros_like(acc_ref)

    # Steady state: accumulate 128-lane-group partial sums.  Each static slice
    # is one lane tile of the x block with the same layout as acc_ref, so this
    # lowers to pure VPU vadds (no XLU reduce / relayout inside the loop).
    hw_tile = x_ref.shape[-1]
    n_groups = hw_tile // 128
    psum = x_ref[:, :, 0:128].astype(jnp.float32)
    for g in range(1, n_groups):
        psum = psum + x_ref[:, :, g * 128:(g + 1) * 128].astype(jnp.float32)
    acc_ref[...] += psum

    @pl.when(k == pl.num_programs(1) - 1)
    def _finalize():
        # Single cross-lane reduce + FC per batch tile.  1/HW is already folded
        # into w_ref, so pooled @ w == mean-pool @ W^T.
        pooled = jnp.sum(acc_ref[...], axis=-1)                 # [b_tile, C]
        out = jnp.dot(pooled, w_ref[...],
                      preferred_element_type=jnp.float32) + b_ref[...]
        o_ref[0] = out.astype(o_ref.dtype)


def _round_up(x, m):
    return ((x + m - 1) // m) * m


def _x_tile_budget_bytes():
    """Per-x-tile VMEM budget.  v7x-class parts (<=64 MiB VMEM, ~3.2 TB/s HBM)
    want larger tiles to amortize the ~0.35 us/step grid overhead; v5e/v6e
    (128 MiB physical VMEM, slower HBM) stay at 4 MiB."""
    try:
        info = pltpu.get_tpu_info()
        vmem = getattr(info, "vmem_capacity_bytes", None)
        if vmem is not None and vmem <= 64 * 1024 * 1024:
            return 8 * 1024 * 1024
    except Exception:
        pass
    return 4 * 1024 * 1024


def prepare_fc_params(weight, bias, hw, out_pad):
    """One-time parameter prep (keep off the per-call path): transpose to
    [C, out], fold the 1/(H*W) mean-pool scale into W, zero-pad to a
    lane-dense 128-multiple output width."""
    out_dim = weight.shape[0]
    w = (weight.T.astype(jnp.float32)) * (1.0 / hw)
    w = jnp.pad(w, ((0, 0), (0, out_pad - out_dim)))            # [C, out_pad]
    b = jnp.pad(bias.astype(jnp.float32),
                (0, out_pad - out_dim)).reshape(1, out_pad)     # [1, out_pad]
    return w, b


def siamese_decoder_forward(x_nchw, w_prepped, b_prepped, out_dim):
    """x_nchw: [B, C, H, W]; w_prepped: [C, out_pad]; b_prepped: [1, out_pad]."""
    B, C, H, W = x_nchw.shape
    HW = H * W
    out_pad = w_prepped.shape[1]
    itemsize = x_nchw.dtype.itemsize
    x = x_nchw.reshape(B, C, HW)                       # pure reshape, no transpose

    # ---- batch tiling: bounded tile, padded cdiv-style grid, >=2 batch tiles
    # whenever B >= 2 so both v7x TensorCores get work. ----
    if B >= 16:
        b_tile = 8
    elif B >= 2:
        b_tile = (B + 1) // 2
    else:
        b_tile = 1
        # TODO(synk): for B == 1 on v7x, split HW over a leading parallel grid
        # axis (two partial accumulators) so the second TensorCore isn't idle.
    B_pad = _round_up(B, b_tile)

    # ---- spatial tiling: lane-dense tile, HW zero-padded to a tile multiple
    # (exact: the 1/HW scale lives in w_prepped, so pad lanes sum to 0). ----
    budget = _x_tile_budget_bytes()
    max_lanes = max(128, (budget // max(1, b_tile * C * itemsize)) // 128 * 128)
    hw_tile = min(_round_up(HW, 128), max_lanes)
    hw_padded = _round_up(HW, hw_tile)

    if (B_pad != B) or (hw_padded != HW):
        x = jnp.pad(x, ((0, B_pad - B), (0, 0), (0, hw_padded - HW)))

    grid = (B_pad // b_tile, hw_padded // hw_tile)     # (parallel, reduction)

    # Explicit VMEM budget: double-buffered x tile + resident params/output
    # + accumulator scratch, with margin.  Stays well under v7x's 64 MiB.
    x_tile_bytes = b_tile * C * hw_tile * itemsize
    w_bytes = C * out_pad * 4
    bias_bytes = out_pad * 4
    o_tile_bytes = b_tile * out_pad * itemsize
    acc_bytes = b_tile * C * 128 * 4
    vmem_limit = int(max(2 * x_tile_bytes
                         + 2 * (w_bytes + bias_bytes + o_tile_bytes)
                         + acc_bytes + (4 << 20),
                         16 << 20))

    cost = pl.CostEstimate(
        flops=int(B_pad * C * hw_padded + 2 * B_pad * C * out_pad),
        transcendentals=0,
        bytes_accessed=int(B_pad * C * hw_padded * itemsize + w_bytes
                           + bias_bytes + B_pad * out_pad * itemsize),
    )

    out3 = pl.pallas_call(
        _siamese_decoder_kernel,
        out_shape=jax.ShapeDtypeStruct((grid[0], b_tile, out_pad), x_nchw.dtype),
        grid=grid,
        in_specs=[
            # x: new spatial tile every reduction step, new batch tile per bi.
            # (If an xprof trace ever shows exposed DMA here, add
            #  pipeline_mode=pl.Buffered(3) and re-check the VMEM budget.)
            pl.BlockSpec((b_tile, C, hw_tile), lambda bi, k: (bi, 0, k)),
            # weight / bias: constant index_map -> fetched once, kept resident.
            pl.BlockSpec((C, out_pad), lambda bi, k: (0, 0)),
            pl.BlockSpec((1, out_pad), lambda bi, k: (0, 0)),
        ],
        # Output block constant across the reduction axis -> resident; written
        # only in the k==last finalize.  The trailing two dims are full-extent
        # / lane-dense, so the block shape is legal for any b_tile.
        out_specs=pl.BlockSpec((1, b_tile, out_pad), lambda bi, k: (bi, 0, 0)),
        scratch_shapes=[pltpu.VMEM((b_tile, C, 128), jnp.float32)],
        compiler_params=pltpu.CompilerParams(
            dimension_semantics=("parallel", "arbitrary"),
            vmem_limit_bytes=vmem_limit),
        cost_estimate=cost,
    )(x, w_prepped, b_prepped)

    out = out3.reshape(B_pad, out_pad)
    return out[:B, :out_dim]


def siamese_decoder(x_nchw, weight, bias):
    """Forward pass of SiameseDecoder.  weight: [out_dim, C] (PyTorch layout)."""
    _, _, H, W = x_nchw.shape
    out_dim = weight.shape[0]
    out_pad = _round_up(out_dim, 128)
    w, b = prepare_fc_params(weight, bias, H * W, out_pad)
    return siamese_decoder_forward(x_nchw, w, b, out_dim)


def _reference(x_nchw, weight, bias):
    pooled = jnp.mean(x_nchw, axis=(2, 3))             # [B, C]
    return pooled @ weight.T + bias[None, :]           # [B, out_dim]


if __name__ == "__main__":
    # Module hyperparameters (synthetic, deterministic):
    #   in_dim = (4,), num_pieces = 2  ->  fc in_features = 8  (== channels C)
    #   out_dim = 32
    in_dim0 = 4
    num_pieces = 2
    C = in_dim0 * num_pieces
    out_dim = 32
    B, H, W = 2, 16, 16

    key = jax.random.PRNGKey(0)
    kx, kw, kb = jax.random.split(key, 3)

    x = jax.random.normal(kx, (B, C, H, W), dtype=jnp.float32)
    # Deterministic "Linear" parameters (PyTorch layout: [out_dim, in_features]).
    bound = 1.0 / (C ** 0.5)
    weight = jax.random.uniform(kw, (out_dim, C), minval=-bound, maxval=bound,
                                dtype=jnp.float32)
    bias = jax.random.uniform(kb, (out_dim,), minval=-bound, maxval=bound,
                              dtype=jnp.float32)

    out = siamese_decoder(x, weight, bias)
    out = jax.block_until_ready(out)

    ref = _reference(x, weight, bias)
    assert out.shape == (B, out_dim), out.shape
    assert jnp.allclose(out, ref, atol=1e-5, rtol=1e-5), float(
        jnp.max(jnp.abs(out - ref)))

    print("KERNEL_OK")
</pallas_src>

<mosaic_0001>
module attributes {stable_mosaic.version = 11 : i64} {
  func.func @_siamese_decoder_kernel(%arg0: i32, %arg1: i32, %arg2: memref<1x8x256xf32, #tpu.memory_space<vmem>>, %arg3: memref<8x128xf32, #tpu.memory_space<vmem>>, %arg4: memref<1x128xf32, #tpu.memory_space<vmem>>, %arg5: memref<1x1x128xf32, #tpu.memory_space<vmem>>, %arg6: memref<1x8x128xf32, #tpu.memory_space<vmem>>) attributes {dimension_semantics = [#tpu.dimension_semantics<parallel>, #tpu.dimension_semantics<arbitrary>], iteration_bounds = array<i64: 2, 1>, scalar_prefetch = 0 : i64, scratch_operands = 1 : i64, tpu.core_type = #tpu.core_type<tc>, window_params = [{transform_indices = @transform_0, window_bounds = array<i64: 1, 8, 256>}, {pipeline_mode = #tpu.pipeline_mode<synchronous>, transform_indices = @transform_1, window_bounds = array<i64: 8, 128>}, {pipeline_mode = #tpu.pipeline_mode<synchronous>, transform_indices = @transform_2, window_bounds = array<i64: 1, 128>}, {transform_indices = @transform_3, window_bounds = array<i64: 1, 1, 128>}]} {
    %c0_i32 = arith.constant 0 : i32
    %0 = arith.cmpi eq, %arg1, %c0_i32 : i32
    %1 = arith.extui %0 : i1 to i32
    %c0_i32_0 = arith.constant 0 : i32
    %2 = arith.cmpi ne, %1, %c0_i32_0 : i32
    scf.if %2 {
      %cst = arith.constant 0.000000e+00 : f32
      %12 = vector.broadcast %cst : f32 to vector<1x8x128xf32>
      %c0_13 = arith.constant 0 : index
      %c0_14 = arith.constant 0 : index
      %c0_15 = arith.constant 0 : index
      %13 = vector.load %arg6[%c0_13, %c0_14, %c0_15] : memref<1x8x128xf32, #tpu.memory_space<vmem>>, vector<1x8x128xf32>
      tpu.vector_store %arg6[%c0_13, %c0_14, %c0_15], %12 {strides = array<i32>} : memref<1x8x128xf32, #tpu.memory_space<vmem>>, vector<1x8x128xf32>,
    } else {
    }
    %c0 = arith.constant 0 : index
    %c0_1 = arith.constant 0 : index
    %c0_2 = arith.constant 0 : index
    %3 = vector.load %arg2[%c0, %c0_1, %c0_2] : memref<1x8x256xf32, #tpu.memory_space<vmem>>, vector<1x8x128xf32>
    %c0_3 = arith.constant 0 : index
    %c0_4 = arith.constant 0 : index
    %c128 = arith.constant 128 : index
    %4 = vector.load %arg2[%c0_3, %c0_4, %c128] : memref<1x8x256xf32, #tpu.memory_space<vmem>>, vector<1x8x128xf32>
    %5 = arith.addf %3, %4 : vector<1x8x128xf32>
    %c0_5 = arith.constant 0 : index
    %c0_6 = arith.constant 0 : index
    %c0_7 = arith.constant 0 : index
    %6 = vector.load %arg6[%c0_5, %c0_6, %c0_7] : memref<1x8x128xf32, #tpu.memory_space<vmem>>, vector<1x8x128xf32>
    %7 = arith.addf %6, %5 : vector<1x8x128xf32>
    %c0_8 = arith.constant 0 : index
    %c0_9 = arith.constant 0 : index
    %c0_10 = arith.constant 0 : index
    %8 = vector.load %arg6[%c0_8, %c0_9, %c0_10] : memref<1x8x128xf32, #tpu.memory_space<vmem>>, vector<1x8x128xf32>
    tpu.vector_store %arg6[%c0_8, %c0_9, %c0_10], %7 {strides = array<i32>} : memref<1x8x128xf32, #tpu.memory_space<vmem>>, vector<1x8x128xf32>,
    %c0_i32_11 = arith.constant 0 : i32
    %9 = arith.cmpi eq, %arg1, %c0_i32_11 : i32
    %10 = arith.extui %9 : i1 to i32
    %c0_i32_12 = arith.constant 0 : i32
    %11 = arith.cmpi ne, %10, %c0_i32_12 : i32
    scf.if %11 {
      %c0_13 = arith.constant 0 : index
      %c0_14 = arith.constant 0 : index
      %c0_15 = arith.constant 0 : index
      %12 = vector.load %arg6[%c0_13, %c0_14, %c0_15] : memref<1x8x128xf32, #tpu.memory_space<vmem>>, vector<1x8x128xf32>
      %cst = arith.constant dense<0.000000e+00> : vector<1x8xf32>
      %13 = vector.multi_reduction <add>, %12, %cst [2] : vector<1x8x128xf32> to vector<1x8xf32>
      %c0_16 = arith.constant 0 : index
      %c0_17 = arith.constant 0 : index
      %14 = vector.load %arg3[%c0_16, %c0_17] : memref<8x128xf32, #tpu.memory_space<vmem>>, vector<8x128xf32>
      %cst_18 = arith.constant dense<0.000000e+00> : vector<1x128xf32>
      %15 = tpu.matmul %13, %14, %cst_18 {dimension_numbers = #tpu.dot_dimension_numbers<[1], [0], [0], [1], [0, 0, 1, 1], [], []>} : vector<1x8xf32>, vector<8x128xf32>, vector<1x128xf32> -> vector<1x128xf32>
      %c0_19 = arith.constant 0 : index
      %c0_20 = arith.constant 0 : index
      %16 = vector.load %arg4[%c0_19, %c0_20] : memref<1x128xf32, #tpu.memory_space<vmem>>, vector<1x128xf32>
      %17 = arith.addf %15, %16 : vector<1x128xf32>
      %c0_21 = arith.constant 0 : index
      %c0_22 = arith.constant 0 : index
      %c0_23 = arith.constant 0 : index
      %18 = vector.load %arg5[%c0_21, %c0_22, %c0_23] : memref<1x1x128xf32, #tpu.memory_space<vmem>>, vector<1x1x128xf32>
      %19 = vector.shape_cast %18 : vector<1x1x128xf32> to vector<1x128xf32>
      %20 = vector.shape_cast %17 : vector<1x128xf32> to vector<1x1x128xf32>
      tpu.vector_store %arg5[%c0_21, %c0_22, %c0_23], %20 {strides = array<i32>} : memref<1x1x128xf32, #tpu.memory_space<vmem>>, vector<1x1x128xf32>,
    } else {
    }
    return
  }
  func.func @transform_0(%arg0: i32, %arg1: i32) -> (i32, i32, i32) {
    %c0_i32 = arith.constant 0 : i32
    %c0_i32_0 = arith.constant 0 : i32
    return %arg0, %c0_i32, %arg1 : i32, i32, i32
  }
  func.func @transform_1(%arg0: i32, %arg1: i32) -> (i32, i32) {
    %c0_i32 = arith.constant 0 : i32
    %c0_i32_0 = arith.constant 0 : i32
    %c0_i32_1 = arith.constant 0 : i32
    return %c0_i32, %c0_i32_0 : i32, i32
  }
  func.func @transform_2(%arg0: i32, %arg1: i32) -> (i32, i32) {
    %c0_i32 = arith.constant 0 : i32
    %c0_i32_0 = arith.constant 0 : i32
    %c0_i32_1 = arith.constant 0 : i32
    return %c0_i32, %c0_i32_0 : i32, i32
  }
  func.func @transform_3(%arg0: i32, %arg1: i32) -> (i32, i32, i32) {
    %c0_i32 = arith.constant 0 : i32
    %c0_i32_0 = arith.constant 0 : i32
    %c0_i32_1 = arith.constant 0 : i32
    return %arg0, %c0_i32, %c0_i32_0 : i32, i32, i32
  }
}

</mosaic_0001>

<llo_original>
// kernel: tpu_custom_call.1
$region0: #{tpu_custom_call.1}
  #allocation0 [shape = 'u32[]', space=smem, size = 0x4, offset = 0x4, fixed_abs, tag = 'smem constant byte address 0x4 - core index']
  #allocation1 [shape = 'u32[72,128]{1,0:T(1,128)}', space=vmem, size = 0x9000, scoped, tag = 'internal scratch']
  #allocation2 [shape = 'f32[1,8,128]{2,1,0:T(8,128)}', space=vmem, size = 0x1000, scoped, tag = 'scratch operand']
  %s0 = inlined_call_operand.hbm [shape: f32[2,8,256], index: 0, kind: input, shape index: {}]
  %s1 = inlined_call_operand.hbm [shape: f32[8,128], index: 1, kind: input, shape index: {}]
  %s2 = inlined_call_operand.vmem [shape: f32[1,128], index: 2, kind: input, shape index: {}]
  %s3 = inlined_call_operand.hbm [shape: f32[2,1,128], index: 3, kind: output, shape index: {}]
  %s4 = sld [smem:[#allocation0]]
  $region61: #{tpu_custom_call.1} parent=0
    _
  %s6 = ssub.s32 1, %s4
  %s7 = scalar_select 0, %s6, %s4
  $region1: #{tpu_custom_call.1} parent=0
    #allocation3 [shape = 'u8[16384]{0}', space=vmem, size = 0x4000, scoped, tag = 'input window, operand 0']
    #allocation4 [shape = 's32[2]{0}', space=sflag, size = 0x8, scoped, tag = 'scoped memory for tpu_custom_call.1']
    #allocation5 [shape = 's32[2]{0}', space=sflag, size = 0x8, scoped, tag = 'scoped memory for tpu_custom_call.1']
    #allocation6 [shape = 'u8[4096]{0}', space=vmem, size = 0x1000, scoped, tag = 'input window, operand 1, single buffered']
    #allocation7 [shape = 's32[1]{0}', space=sflag, size = 0x4, scoped, tag = 'scoped memory for tpu_custom_call.1']
    #allocation8 [shape = 'u8[1024]{0}', space=vmem, size = 0x400, scoped, tag = 'output window, operand 0']
    %8 = vsyncpa [#allocation4], 0
    %s9 = scalar_lea.sflag [#allocation4], 1
    %10 = vsyncpa %s9, 0
    %11 = vsyncpa [#allocation7], 0
    %12 = vsyncpa [#allocation5], 0
    %s13 = scalar_lea.sflag [#allocation5], 1
    %14 = vsyncpa %s13, 0
    loop: start=0, step=1, limit=4
    $region2: #{tpu_custom_call.1} parent=1 // loop_pre_header
      _
    $region3: #{tpu_custom_call.1} parent=1 // loop_header
      %s16 = sphi 0, %s20
      %p17 = scmp.ge.s32.totalorder %s16, 4
      %s23 = sphi 0, %s35
      %s24 = sphi 0, %s31
      %s25 = sphi 0, %s23
      %s26 = sphi 0, %s24
      %s27 = sphi 0, %s25
      %s28 = sphi 0, %s26
      %s40 = sphi 0, %s42
      %s43 = sphi 0, %s40
      %s44 = sphi 0, %s43
      %s60 = sphi 0, %s44
      %s64 = sphi 0, %s64
      %s66 = sphi 0, %s64
      %s67 = sphi 0, %s66
      %s81 = sphi 0, %s67
      %s85 = sphi 0, %s85
      %s87 = sphi 0, %s85
      %s88 = sphi 0, %s87
      %s102 = sphi 0, %s88
      %s108 = sphi 0, %s110
      %s111 = sphi 0, %s108
      %s112 = sphi 0, %s111
      %s128 = sphi 0, %s112
    $region4: #{tpu_custom_call.1} parent=1 // loop_header_branch
      %19 = sbr.rel (%p17) target = $region8
    $region5: #{tpu_custom_call.1} parent=1 // loop_body
      %s21 = ssub.s32 %s16, 1
      %s22 = ssub.s32 %s16, 2
      %s29 = sadd.s32 1, %s24
      %p30 = scmp.ge.s32.totalorder %s29, 1
      %s31 = scalar_select %p30, 0, %s29
      %s32 = sadd.s32 1, %s23
      %s33 = scalar_select %p30, %s32, %s23
      %p34 = scmp.ge.s32.totalorder %s33, 2
      %s35 = scalar_select %p34, 0, %s33
      %s36 = ssub.s32 %s23, %s35
      %s37 = ssub.s32 %s24, %s31
      %s38 = sor.u32 %s36, %s37
      %p39 = scmp.eq.s32.totalorder %s38, 0
      %s41 = sadd.s32 %s40, 1
      %s42 = scalar_select %p39, %s40, %s41
      %p45 = pneg %p39
      %p46 = scmp.eq.s32.totalorder %s16, 1
      %p47 = por %p45, %p46
      %p48 = scmp.ne.s32.totalorder %s40, %s43
      %p49 = scmp.eq.s32.totalorder %s16, 0
      %p50 = por %p48, %p49
      %p51 = scmp.ne.s32.totalorder %s40, %s43
      %p52 = scmp.eq.s32.totalorder %s21, 1
      %p53 = por %p51, %p52
      %p54 = scmp.ne.s32.totalorder %s43, %s44
      %p55 = scmp.eq.s32.totalorder %s21, 0
      %p56 = por %p54, %p55
      %p57 = scmp.ne.s32.totalorder %s43, %s44
      %p58 = scmp.eq.s32.totalorder %s22, 1
      %p59 = por %p57, %p58
      %p61 = scmp.ne.s32.totalorder %s44, %s60
      %p62 = scmp.eq.s32.totalorder %s22, 0
      %p63 = por %p61, %p62
      %s65 = sadd.s32 %s64, 1
      %p68 = scmp.eq.s32.totalorder %s16, 1
      %p69 = scmp.ne.s32.totalorder %s64, %s66
      %p70 = scmp.eq.s32.totalorder %s16, 0
      %p71 = por %p69, %p70
      %p72 = scmp.ne.s32.totalorder %s64, %s66
      %p73 = scmp.eq.s32.totalorder %s21, 1
      %p74 = por %p72, %p73
      %p75 = scmp.ne.s32.totalorder %s66, %s67
      %p76 = scmp.eq.s32.totalorder %s21, 0
      %p77 = por %p75, %p76
      %p78 = scmp.ne.s32.totalorder %s66, %s67
      %p79 = scmp.eq.s32.totalorder %s22, 1
      %p80 = por %p78, %p79
      %p82 = scmp.ne.s32.totalorder %s67, %s81
      %p83 = scmp.eq.s32.totalorder %s22, 0
      %p84 = por %p82, %p83
      %s86 = sadd.s32 %s85, 1
      %p89 = scmp.eq.s32.totalorder %s16, 1
      %p90 = scmp.ne.s32.totalorder %s85, %s87
      %p91 = scmp.eq.s32.totalorder %s16, 0
      %p92 = por %p90, %p91
      %p93 = scmp.ne.s32.totalorder %s85, %s87
      %p94 = scmp.eq.s32.totalorder %s21, 1
      %p95 = por %p93, %p94
      %p96 = scmp.ne.s32.totalorder %s87, %s88
      %p97 = scmp.eq.s32.totalorder %s21, 0
      %p98 = por %p96, %p97
      %p99 = scmp.ne.s32.totalorder %s87, %s88
      %p100 = scmp.eq.s32.totalorder %s22, 1
      %p101 = por %p99, %p100
      %p103 = scmp.ne.s32.totalorder %s88, %s102
      %p104 = scmp.eq.s32.totalorder %s22, 0
      %p105 = por %p103, %p104
      %s106 = ssub.s32 %s23, %s35
      %p107 = scmp.eq.s32.totalorder %s106, 0
      %s109 = sadd.s32 %s108, 1
      %s110 = scalar_select %p107, %s108, %s109
      %p113 = pneg %p107
      %p114 = scmp.eq.s32.totalorder %s16, 1
      %p115 = por %p113, %p114
      %p116 = scmp.ne.s32.totalorder %s108, %s111
      %p117 = scmp.eq.s32.totalorder %s16, 0
      %p118 = por %p116, %p117
      %p119 = scmp.ne.s32.totalorder %s108, %s111
      %p120 = scmp.eq.s32.totalorder %s21, 1
      %p121 = por %p119, %p120
      %p122 = scmp.ne.s32.totalorder %s111, %s112
      %p123 = scmp.eq.s32.totalorder %s21, 0
      %p124 = por %p122, %p123
      %p125 = scmp.ne.s32.totalorder %s111, %s112
      %p126 = scmp.eq.s32.totalorder %s22, 1
      %p127 = por %p125, %p126
      %p129 = scmp.ne.s32.totalorder %s112, %s128
      %p130 = scmp.eq.s32.totalorder %s22, 0
      %p131 = por %p129, %p130
      %p132 = scmp.le.s32.totalorder 1, %s16
      %p133 = scmp.lt.s32.totalorder %s16, 3
      %p134 = pnand %p132, %p133
      %p135 = pneg %p134
      // Predicated region
      $region9: #{tpu_custom_call.1} parent=5 // pred_check
        _
      $region10: #{tpu_custom_call.1} parent=5 // pred_check_branch
        %137 = sbr.rel (%p134) target = $region12
      $region11: #{tpu_custom_call.1} parent=5 // pred_region
        %s138 = ssub.s32 %s16, 1
        // Predicated region
        $region13: #{tpu_custom_call.1} parent=11 // pred_check
          %p139 = pneg %p77
        $region14: #{tpu_custom_call.1} parent=11 // pred_check_branch
          %141 = sbr.rel (%p139) target = $region16
        $region15: #{tpu_custom_call.1} parent=11 // pred_region
          %143 = vsyncadd [#allocation7], 0
          %s145 = sshll.u32 %s1, 4
          %s146 = int_to_ptr.hbm [resolvable:$true] %s145
          %s147 = sshll.u32 [#allocation6], 4
          %s148 = int_to_ptr.vmem [resolvable:$true] %s147
          %150 = dma.hbm_to_vmem [thread:$0]  %s146, 128, %s148, [#allocation7]
        $region16: #{tpu_custom_call.1} parent=11 // pred_fallthru
          _
        // Predicated region
        $region17: #{tpu_custom_call.1} parent=11 // pred_check
          %p151 = pneg %p98
        $region18: #{tpu_custom_call.1} parent=11 // pred_check_branch
          %153 = sbr.rel (%p151) target = $region20
        $region19: #{tpu_custom_call.1} parent=11 // pred_region
          _
        $region20: #{tpu_custom_call.1} parent=11 // pred_fallthru
          _
      $region12: #{tpu_custom_call.1} parent=5 // pred_fallthru
        _
      %p154 = scmp.lt.s32.totalorder %s16, 2
      // Predicated region
      $region21: #{tpu_custom_call.1} parent=5 // pred_check
        %p155 = pneg %p154
      $region22: #{tpu_custom_call.1} parent=5 // pred_check_branch
        %157 = sbr.rel (%p155) target = $region24
      $region23: #{tpu_custom_call.1} parent=5 // pred_region
        // Predicated region
        $region25: #{tpu_custom_call.1} parent=23 // pred_check
          %p158 = pneg %p50
        $region26: #{tpu_custom_call.1} parent=23 // pred_check_branch
          %160 = sbr.rel (%p158) target = $region28
        $region27: #{tpu_custom_call.1} parent=23 // pred_region
          %s161 = sand.u32 %s40, 1
          %s162 = scalar_lea.sflag [#allocation4], %s161
          %s163 = sand.u32 %s40, 1
          %s164 = smul.addr %s163, 16
          %s165 = scalar_lea.vmem [#allocation3], %s164
          %s166 = smul.u32 2, %s24
          %168 = vsyncadd %s162, 0
          %s169 = smul.addr %s23, 2
          %s170 = sadd.s32 %s166, %s169
          %s171 = smul.addr %s170, 8
          %s172 = scalar_lea.hbm %s0, %s171
          %s174 = sshll.u32 %s172, 4
          %s175 = int_to_ptr.hbm [resolvable:$true] %s174
          %s176 = sshll.u32 %s165, 4
          %s177 = int_to_ptr.vmem [resolvable:$true] %s176
          %179 = dma.hbm_to_vmem [thread:$0]  %s175, 256, %s177, %s162
        $region28: #{tpu_custom_call.1} parent=23 // pred_fallthru
          _
      $region24: #{tpu_custom_call.1} parent=5 // pred_fallthru
        _
      %p180 = scmp.le.s32.totalorder 1, %s16
      %p181 = scmp.lt.s32.totalorder %s16, 3
      %p182 = pnand %p180, %p181
      %p183 = pneg %p182
      // Predicated region
      $region29: #{tpu_custom_call.1} parent=5 // pred_check
        _
      $region30: #{tpu_custom_call.1} parent=5 // pred_check_branch
        %185 = sbr.rel (%p182) target = $region32
      $region31: #{tpu_custom_call.1} parent=5 // pred_region
        %s186 = ssub.s32 %s16, 1
        %s187 = sand.u32 %s43, 1
        %s188 = scalar_lea.sflag [#allocation4], %s187
        %s189 = sand.u32 %s43, 1
        %s190 = smul.addr %s189, 16
        %s191 = scalar_lea.vmem [#allocation3], %s190
        // Predicated region
        $region33: #{tpu_custom_call.1} parent=31 // pred_check
          %p192 = pneg %p56
        $region34: #{tpu_custom_call.1} parent=31 // pred_check_branch
          %194 = sbr.rel (%p192) target = $region36
        $region35: #{tpu_custom_call.1} parent=31 // pred_region
          %196 = dma.done %s188, 256
        $region36: #{tpu_custom_call.1} parent=31 // pred_fallthru
          _
        // Predicated region
        $region37: #{tpu_custom_call.1} parent=31 // pred_check
          %p197 = pneg %p77
        $region38: #{tpu_custom_call.1} parent=31 // pred_check_branch
          %199 = sbr.rel (%p197) target = $region40
        $region39: #{tpu_custom_call.1} parent=31 // pred_region
          %201 = dma.done [#allocation7], 128
        $region40: #{tpu_custom_call.1} parent=31 // pred_fallthru
          _
        %s202 = sand.u32 %s43, 1
        %s203 = scalar_lea.sflag [#allocation4], %s202
        %s204 = sand.u32 %s43, 1
        %s205 = smul.addr %s204, 16
        %s206 = scalar_lea.vmem [#allocation3], %s205
        %p207 = pneg %p56
        %p208 = pneg %p53
        %p209 = pneg %p77
        %p210 = pneg %p74
        %p211 = pneg %p98
        %p212 = pneg %p95
        %p213 = pneg %p124
        %p214 = pneg %p121
        %s215 = sand.u32 %s111, 1
        %s216 = scalar_lea.sflag [#allocation5], %s215
        %s217 = sand.u32 %s111, 1
        %s218 = scalar_lea.vmem [#allocation8], %s217
        %s219 = smul.u32 2, %s26
        %p220 = scmp.eq.s32.totalorder %s26, 0
        // Predicated region
        $region41: #{tpu_custom_call.1} parent=31 // pred_check
          %p221 = pneg %p220
        $region42: #{tpu_custom_call.1} parent=31 // pred_check_branch
          %223 = sbr.rel (%p221) target = $region44
        $region43: #{tpu_custom_call.1} parent=31 // pred_region
          %224 = vst [vmem:[#allocation2] sm:$0xff] 0.0
        $region44: #{tpu_custom_call.1} parent=31 // pred_fallthru
          _
        %v225 = vld [vmem:[%s191] sm:$0xff]
        %v226 = vld [vmem:[%s191 + $0x8] sm:$0xff]
        %v227 = vadd.f32 %v225, %v226
        %v228 = vld [vmem:[#allocation2] sm:$0xff]
        %v229 = vadd.f32 %v228, %v227
        %230 = vst [vmem:[#allocation2] sm:$0xff] %v229
        // Predicated region
        $region45: #{tpu_custom_call.1} parent=31 // pred_check
          %p231 = pneg %p220
        $region46: #{tpu_custom_call.1} parent=31 // pred_check_branch
          %233 = sbr.rel (%p231) target = $region48
        $region47: #{tpu_custom_call.1} parent=31 // pred_region
          %v234 = vld [vmem:[#allocation2] sm:$0xff]
          %235 = vadd.xlane.f32.xlu0 %v234
          %v236 = vpop.xlane.xlu0 %235
          %v237 = vld [vmem:[#allocation6] sm:$0xff]
          %v238 = vld [vmem:[%s2] sm:$0x1]
          %v240 = vlaneseq
          %v241 = vand.u32 %v240, 127
          %v242 = vperm.slane %v236, %v241
          %vm243 = vcmask 64512
          %v244 = vsel %vm243, %v242, 0
          %246 = vmatpush.msra.mxu0 0.0
          %247 = vmatpush.msra.mxu0 0.0
          %248 = vmatpush.msra.mxu0 0.0
          %249 = vmatpush.msra.mxu0 0.0
          %250 = vmatpush.msra.mxu0 0.0
          %251 = vmatpush.msra.mxu0 0.0
          %252 = vmatpush.msra.mxu0 0.0
          %253 = vmatpush.msra.mxu0 0.0
          %254 = vmatpush.msra.mxu0 0.0
          %255 = vmatpush.msra.mxu0 0.0
          %256 = vmatpush.msra.mxu0 0.0
          %257 = vmatpush.msra.mxu0 0.0
          %258 = vmatpush.msra.mxu0 0.0
          %259 = vmatpush.msra.mxu0 0.0
          %260 = vmatpush.msra.mxu0 0.0
          %261 = vmatpush.msra.mxu0 %v237
          %262 = vmatmul.f32.gmra.mxu0 %v244
          %v263 = vpop.f32.mrf.mxu0
          %v264 = vadd.f32 %v238, %v263
          %265 = vdwg.mxu0
          %266 = vst [vmem:[%s218] sm:$0x1] %v264
        $region48: #{tpu_custom_call.1} parent=31 // pred_fallthru
          _
        %s267 = sand.u32 %s111, 1
        %s268 = scalar_lea.sflag [#allocation5], %s267
        %s269 = sand.u32 %s111, 1
        %s270 = scalar_lea.vmem [#allocation8], %s269
        // Predicated region
        $region49: #{tpu_custom_call.1} parent=31 // pred_check
          %p271 = pneg %p121
        $region50: #{tpu_custom_call.1} parent=31 // pred_check_branch
          %273 = sbr.rel (%p271) target = $region52
        $region51: #{tpu_custom_call.1} parent=31 // pred_region
          %275 = vsyncadd %s268, 0
          %s276 = scalar_lea.hbm %s3, %s25
          %s278 = sshll.u32 %s270, 4
          %s279 = int_to_ptr.vmem [resolvable:$true] %s278
          %s280 = sshll.u32 %s276, 4
          %s281 = int_to_ptr.hbm [resolvable:$true] %s280
          %283 = dma.vmem_to_hbm [thread:$0]  %s279, 16, %s281, %s268
        $region52: #{tpu_custom_call.1} parent=31 // pred_fallthru
          _
      $region32: #{tpu_custom_call.1} parent=5 // pred_fallthru
        _
      %p284 = scmp.le.s32.totalorder 2, %s16
      // Predicated region
      $region53: #{tpu_custom_call.1} parent=5 // pred_check
        %p285 = pneg %p284
      $region54: #{tpu_custom_call.1} parent=5 // pred_check_branch
        %287 = sbr.rel (%p285) target = $region56
      $region55: #{tpu_custom_call.1} parent=5 // pred_region
        %s288 = ssub.s32 %s16, 2
        // Predicated region
        $region57: #{tpu_custom_call.1} parent=55 // pred_check
          %p289 = pneg %p127
        $region58: #{tpu_custom_call.1} parent=55 // pred_check_branch
          %291 = sbr.rel (%p289) target = $region60
        $region59: #{tpu_custom_call.1} parent=55 // pred_region
          %s292 = sand.u32 %s112, 1
          %s293 = scalar_lea.sflag [#allocation5], %s292
          %s294 = sand.u32 %s112, 1
          %s295 = scalar_lea.vmem [#allocation8], %s294
          %297 = dma.done %s293, 16
        $region60: #{tpu_custom_call.1} parent=55 // pred_fallthru
          _
      $region56: #{tpu_custom_call.1} parent=5 // pred_fallthru
        _
    $region6: #{tpu_custom_call.1} parent=1 // loop_footer
      %s20 = sadd.s32 1, %s16
    $region7: #{tpu_custom_call.1} parent=1 // loop_footer_branch
      %15 = sbr.rel target = $region3
    $region8: #{tpu_custom_call.1} parent=1 // loop_exit
      _
    %298 = vsyncpa [#allocation4], 1
    %s299 = scalar_lea.sflag [#allocation4], 1
    %300 = vsyncpa %s299, 1
    %301 = vsyncpa [#allocation7], 1
    %302 = vsyncpa [#allocation5], 1
    %s303 = scalar_lea.sflag [#allocation5], 1
    %304 = vsyncpa %s303, 1

</llo_original>
